<compile_context>
chip_gen: v5e
topology: v5e:2x2
jax: 0.10.0
libtpu: 0.0.40
codegen_flags: <defaults>
</compile_context>

<pallas_src>
import functools

import numpy as np

import jax
import jax.numpy as jnp
from jax.experimental import pallas as pl
from jax.experimental.pallas import tpu as pltpu


def _mlp_gumbel_kernel(x_ref,
                       w1_ref, b1_ref,
                       w2_ref, b2_ref,
                       w3_ref, b3_ref,
                       w4d_ref, b4d_ref,
                       noise_ref,
                       out_ref):
    """3 f32 MXU matmuls + ReLU chain, one folded bf16 final matmul, logistic test.

    d = (l0 - l1) is computed directly via the pre-folded difference weight; the hard
    gumbel-softmax channel-0 selection is then `d + logistic_noise >= 0`.
    """
    x = x_ref[...]
    h = jnp.maximum(
        jnp.dot(x, w1_ref[...], preferred_element_type=jnp.float32) + b1_ref[...], 0.0)
    h = jnp.maximum(
        jnp.dot(h, w2_ref[...], preferred_element_type=jnp.float32) + b2_ref[...], 0.0)
    h = jnp.maximum(
        jnp.dot(h, w3_ref[...], preferred_element_type=jnp.float32) + b3_ref[...], 0.0)

    # Single folded final matmul: bf16 activations x bf16 difference-weights, f32 acc.
    d = jnp.dot(h.astype(jnp.bfloat16), w4d_ref[...],
                preferred_element_type=jnp.float32) + b4d_ref[...]

    # Hard gumbel-softmax (tau=1, 2 classes), channel 0 of the one-hot:
    # equals 1 iff (l0 - l1) + (g0 - g1) >= 0, with g0 - g1 ~ Logistic(0, 1).
    out_ref[...] = jnp.where(d + noise_ref[...] >= 0.0, 1.0, 0.0).astype(out_ref.dtype)


def simple_mlp_forward(x, params, noise, n_nodes):
    """x: (B, cond_dim) f32, noise: (B, np_pad) f32 Logistic(0,1).

    Returns the symmetric zero-diagonal adjacency (B, n_nodes, n_nodes).
    """
    w1, b1, w2, b2, w3, b3, w4d, b4d = params
    B = x.shape[0]
    n_pairs = n_nodes * (n_nodes - 1) // 2
    np_pad = w4d.shape[1]

    vmem = functools.partial(pl.BlockSpec, memory_space=pltpu.MemorySpace.VMEM)
    operands = (x, w1, b1, w2, b2, w3, b3, w4d, b4d, noise)

    # Advisory cost estimate for XLA's scheduler (post-fold: N = np_pad, no transcendentals).
    d0, a0 = w1.shape
    a1 = w2.shape[1]
    a2 = w3.shape[1]
    flops = 2 * B * (d0 * a0 + a0 * a1 + a1 * a2 + a2 * np_pad)
    bytes_accessed = (sum(int(o.size) * o.dtype.itemsize for o in operands)
                      + B * np_pad * 4)

    edge_sel_pad = pl.pallas_call(
        _mlp_gumbel_kernel,
        out_shape=jax.ShapeDtypeStruct((B, np_pad), jnp.float32),
        in_specs=[vmem() for _ in operands],
        out_specs=vmem(),
        cost_estimate=pl.CostEstimate(flops=flops,
                                      transcendentals=0,
                                      bytes_accessed=bytes_accessed),
    )(*operands)

    # Dense symmetric gather straight from the padded buffer (no misaligned slice):
    # idx_map only references pair indices < n_pairs; the diagonal maps to pair 0 and
    # is zeroed by the mask.
    iu0, iu1 = np.triu_indices(n_nodes, k=1)
    idx_map = np.zeros((n_nodes, n_nodes), np.int32)
    idx_map[iu0, iu1] = np.arange(n_pairs, dtype=np.int32)
    idx_map = idx_map + idx_map.T
    mask = (1.0 - np.eye(n_nodes)).astype(np.float32)

    adj = jnp.take(edge_sel_pad, jnp.asarray(idx_map), axis=1) * jnp.asarray(mask)
    return adj


def init_params(key, architecture, cond_dim, n_nodes, n_pairs_pad):
    """torch.nn.Linear-style init; weights stored as (in, out).

    The final layer's interleaved (..., 2) outputs are folded into a single difference
    weight W4d = W4[:, 0::2] - W4[:, 1::2] (subtraction in f32, then cast to bf16),
    zero-padded on N to n_pairs_pad.  Bias folded the same way, kept f32.
    """
    n_pairs = n_nodes * (n_nodes - 1) // 2
    dims = [cond_dim] + list(architecture) + [2 * n_pairs]
    weights, biases = [], []
    for i in range(len(dims) - 1):
        fan_in, fan_out = dims[i], dims[i + 1]
        key, kw, kb = jax.random.split(key, 3)
        bound = 1.0 / (fan_in ** 0.5)
        weights.append(jax.random.uniform(kw, (fan_in, fan_out), jnp.float32,
                                          minval=-bound, maxval=bound))
        biases.append(jax.random.uniform(kb, (1, fan_out), jnp.float32,
                                         minval=-bound, maxval=bound))
    w1, w2, w3, w4 = weights
    b1, b2, b3, b4 = biases

    pad = n_pairs_pad - n_pairs
    w4d = jnp.pad(w4[:, 0::2] - w4[:, 1::2], ((0, 0), (0, pad))).astype(jnp.bfloat16)
    b4d = jnp.pad(b4[:, 0::2] - b4[:, 1::2], ((0, 0), (0, pad)))  # f32

    return (w1, b1, w2, b2, w3, b3, w4d, b4d)


if __name__ == "__main__":
    architecture = [16, 32, 64]
    cond_dim = 7
    n_nodes = 50
    B = 2
    n_pairs = n_nodes * (n_nodes - 1) // 2           # 1225
    NP_PAD = ((n_pairs + 255) // 256) * 256          # 1280 (multiple of 256)

    root = jax.random.PRNGKey(0)
    k_params, k_x, k_noise = jax.random.split(root, 3)

    params = init_params(k_params, architecture, cond_dim, n_nodes, NP_PAD)
    x = jax.random.normal(k_x, (B, cond_dim), jnp.float32)
    # Logistic(0,1) noise = g0 - g1 for two independent Gumbels; one draw per edge.
    noise = jax.random.logistic(k_noise, (B, NP_PAD), jnp.float32)

    adj = simple_mlp_forward(x, params, noise, n_nodes)
    adj = jax.block_until_ready(adj)

    # Sanity: symmetric, zero diagonal, entries in {0, 1}.
    assert adj.shape == (B, n_nodes, n_nodes)
    assert bool(jnp.all(adj == jnp.transpose(adj, (0, 2, 1))))
    assert bool(jnp.all(jnp.diagonal(adj, axis1=1, axis2=2) == 0.0))
    assert bool(jnp.all((adj == 0.0) | (adj == 1.0)))

    print("KERNEL_OK")
</pallas_src>

<mosaic_0001>
module attributes {stable_mosaic.version = 11 : i64} {
  func.func @_mlp_gumbel_kernel(%arg0: memref<2x7xf32, #tpu.memory_space<vmem>>, %arg1: memref<7x16xf32, #tpu.memory_space<vmem>>, %arg2: memref<1x16xf32, #tpu.memory_space<vmem>>, %arg3: memref<16x32xf32, #tpu.memory_space<vmem>>, %arg4: memref<1x32xf32, #tpu.memory_space<vmem>>, %arg5: memref<32x64xf32, #tpu.memory_space<vmem>>, %arg6: memref<1x64xf32, #tpu.memory_space<vmem>>, %arg7: memref<64x1280xbf16, #tpu.memory_space<vmem>>, %arg8: memref<1x1280xf32, #tpu.memory_space<vmem>>, %arg9: memref<2x1280xf32, #tpu.memory_space<vmem>>, %arg10: memref<2x1280xf32, #tpu.memory_space<vmem>>) attributes {dimension_semantics = [], scalar_prefetch = 0 : i64, scratch_operands = 0 : i64, tpu.core_type = #tpu.core_type<tc>} {
    %c0 = arith.constant 0 : index
    %c0_0 = arith.constant 0 : index
    %0 = vector.load %arg0[%c0, %c0_0] : memref<2x7xf32, #tpu.memory_space<vmem>>, vector<2x7xf32>
    %c0_1 = arith.constant 0 : index
    %c0_2 = arith.constant 0 : index
    %1 = vector.load %arg1[%c0_1, %c0_2] : memref<7x16xf32, #tpu.memory_space<vmem>>, vector<7x16xf32>
    %cst = arith.constant dense<0.000000e+00> : vector<2x16xf32>
    %2 = tpu.matmul %0, %1, %cst {dimension_numbers = #tpu.dot_dimension_numbers<[1], [0], [0], [1], [0, 0, 1, 1], [], []>} : vector<2x7xf32>, vector<7x16xf32>, vector<2x16xf32> -> vector<2x16xf32>
    %c0_3 = arith.constant 0 : index
    %c0_4 = arith.constant 0 : index
    %3 = vector.load %arg2[%c0_3, %c0_4] : memref<1x16xf32, #tpu.memory_space<vmem>>, vector<1x16xf32>
    %4 = vector.broadcast %3 : vector<1x16xf32> to vector<2x16xf32>
    %5 = arith.addf %2, %4 : vector<2x16xf32>
    %cst_5 = arith.constant 0.000000e+00 : f32
    %6 = vector.broadcast %cst_5 : f32 to vector<2x16xf32>
    %7 = arith.maximumf %5, %6 : vector<2x16xf32>
    %c0_6 = arith.constant 0 : index
    %c0_7 = arith.constant 0 : index
    %8 = vector.load %arg3[%c0_6, %c0_7] : memref<16x32xf32, #tpu.memory_space<vmem>>, vector<16x32xf32>
    %cst_8 = arith.constant dense<0.000000e+00> : vector<2x32xf32>
    %9 = tpu.matmul %7, %8, %cst_8 {dimension_numbers = #tpu.dot_dimension_numbers<[1], [0], [0], [1], [0, 0, 1, 1], [], []>} : vector<2x16xf32>, vector<16x32xf32>, vector<2x32xf32> -> vector<2x32xf32>
    %c0_9 = arith.constant 0 : index
    %c0_10 = arith.constant 0 : index
    %10 = vector.load %arg4[%c0_9, %c0_10] : memref<1x32xf32, #tpu.memory_space<vmem>>, vector<1x32xf32>
    %11 = vector.broadcast %10 : vector<1x32xf32> to vector<2x32xf32>
    %12 = arith.addf %9, %11 : vector<2x32xf32>
    %cst_11 = arith.constant 0.000000e+00 : f32
    %13 = vector.broadcast %cst_11 : f32 to vector<2x32xf32>
    %14 = arith.maximumf %12, %13 : vector<2x32xf32>
    %c0_12 = arith.constant 0 : index
    %c0_13 = arith.constant 0 : index
    %15 = vector.load %arg5[%c0_12, %c0_13] : memref<32x64xf32, #tpu.memory_space<vmem>>, vector<32x64xf32>
    %cst_14 = arith.constant dense<0.000000e+00> : vector<2x64xf32>
    %16 = tpu.matmul %14, %15, %cst_14 {dimension_numbers = #tpu.dot_dimension_numbers<[1], [0], [0], [1], [0, 0, 1, 1], [], []>} : vector<2x32xf32>, vector<32x64xf32>, vector<2x64xf32> -> vector<2x64xf32>
    %c0_15 = arith.constant 0 : index
    %c0_16 = arith.constant 0 : index
    %17 = vector.load %arg6[%c0_15, %c0_16] : memref<1x64xf32, #tpu.memory_space<vmem>>, vector<1x64xf32>
    %18 = vector.broadcast %17 : vector<1x64xf32> to vector<2x64xf32>
    %19 = arith.addf %16, %18 : vector<2x64xf32>
    %cst_17 = arith.constant 0.000000e+00 : f32
    %20 = vector.broadcast %cst_17 : f32 to vector<2x64xf32>
    %21 = arith.maximumf %19, %20 : vector<2x64xf32>
    %22 = arith.truncf %21 : vector<2x64xf32> to vector<2x64xbf16>
    %c0_18 = arith.constant 0 : index
    %c0_19 = arith.constant 0 : index
    %23 = vector.load %arg7[%c0_18, %c0_19] : memref<64x1280xbf16, #tpu.memory_space<vmem>>, vector<64x1280xbf16>
    %cst_20 = arith.constant dense<0.000000e+00> : vector<2x1280xf32>
    %24 = tpu.matmul %22, %23, %cst_20 {dimension_numbers = #tpu.dot_dimension_numbers<[1], [0], [0], [1], [0, 0, 1, 1], [], []>} : vector<2x64xbf16>, vector<64x1280xbf16>, vector<2x1280xf32> -> vector<2x1280xf32>
    %c0_21 = arith.constant 0 : index
    %c0_22 = arith.constant 0 : index
    %25 = vector.load %arg8[%c0_21, %c0_22] : memref<1x1280xf32, #tpu.memory_space<vmem>>, vector<1x1280xf32>
    %26 = vector.broadcast %25 : vector<1x1280xf32> to vector<2x1280xf32>
    %27 = arith.addf %24, %26 : vector<2x1280xf32>
    %c0_23 = arith.constant 0 : index
    %c0_24 = arith.constant 0 : index
    %28 = vector.load %arg9[%c0_23, %c0_24] : memref<2x1280xf32, #tpu.memory_space<vmem>>, vector<2x1280xf32>
    %29 = arith.addf %27, %28 : vector<2x1280xf32>
    %cst_25 = arith.constant 0.000000e+00 : f32
    %30 = vector.broadcast %cst_25 : f32 to vector<2x1280xf32>
    %31 = arith.cmpf oge, %29, %30 : vector<2x1280xf32>
    %cst_26 = arith.constant 1.000000e+00 : f32
    %cst_27 = arith.constant 0.000000e+00 : f32
    %32 = vector.broadcast %cst_26 : f32 to vector<2x1280xf32>
    %33 = vector.broadcast %cst_27 : f32 to vector<2x1280xf32>
    %34 = arith.select %31, %32, %33 : vector<2x1280xi1>, vector<2x1280xf32>
    %c0_28 = arith.constant 0 : index
    %c0_29 = arith.constant 0 : index
    %35 = vector.load %arg10[%c0_28, %c0_29] : memref<2x1280xf32, #tpu.memory_space<vmem>>, vector<2x1280xf32>
    tpu.vector_store %arg10[%c0_28, %c0_29], %34 {strides = array<i32>} : memref<2x1280xf32, #tpu.memory_space<vmem>>, vector<2x1280xf32>,
    return
  }
}

</mosaic_0001>

<llo_original>
// kernel: tpu_custom_call.1
$region0: #{tpu_custom_call.1}
  #allocation0 [shape = 'u32[]', space=smem, size = 0x4, offset = 0x4, fixed_abs, tag = 'smem constant byte address 0x4 - core index']
  #allocation1 [shape = 'u32[72,128]{1,0:T(1,128)}', space=vmem, size = 0x9000, scoped, tag = 'internal scratch']
  %s0 = inlined_call_operand.hbm [shape: f32[2,7], index: 0, kind: input, shape index: {}]
  %s1 = inlined_call_operand.hbm [shape: f32[7,16], index: 1, kind: input, shape index: {}]
  %s2 = inlined_call_operand.vmem [shape: f32[1,16], index: 2, kind: input, shape index: {}]
  %s3 = inlined_call_operand.hbm [shape: f32[16,32], index: 3, kind: input, shape index: {}]
  %s4 = inlined_call_operand.vmem [shape: f32[1,32], index: 4, kind: input, shape index: {}]
  %s5 = inlined_call_operand.hbm [shape: f32[32,64], index: 5, kind: input, shape index: {}]
  %s6 = inlined_call_operand.vmem [shape: f32[1,64], index: 6, kind: input, shape index: {}]
  %s7 = inlined_call_operand.hbm [shape: bf16[64,1280], index: 7, kind: input, shape index: {}]
  %s8 = inlined_call_operand.hbm [shape: f32[1,1280], index: 8, kind: input, shape index: {}]
  %s9 = inlined_call_operand.hbm [shape: f32[2,1280], index: 9, kind: input, shape index: {}]
  %s10 = inlined_call_operand.hbm [shape: f32[2,1280], index: 10, kind: output, shape index: {}]
  %s11 = sld [smem:[#allocation0]]
  $region78: #{tpu_custom_call.1} parent=0
    _
  %s13 = ssub.s32 1, %s11
  %s14 = scalar_select 0, %s13, %s11
  $region1: #{tpu_custom_call.1} parent=0
    #allocation2 [shape = 'u8[1024]{0}', space=vmem, size = 0x400, scoped, tag = 'input window, operand 0, single buffered']
    #allocation3 [shape = 's32[1]{0}', space=sflag, size = 0x4, scoped, tag = 'scoped memory for tpu_custom_call.1']
    #allocation4 [shape = 's32[1]{0}', space=sflag, size = 0x4, scoped, tag = 'scoped memory for tpu_custom_call.1']
    #allocation5 [shape = 'u8[4096]{0}', space=vmem, size = 0x1000, scoped, tag = 'input window, operand 1, single buffered']
    #allocation6 [shape = 's32[1]{0}', space=sflag, size = 0x4, scoped, tag = 'scoped memory for tpu_custom_call.1']
    #allocation7 [shape = 'u8[8192]{0}', space=vmem, size = 0x2000, scoped, tag = 'input window, operand 3, single buffered']
    #allocation8 [shape = 'u8[16384]{0}', space=vmem, size = 0x4000, scoped, tag = 'input window, operand 5, single buffered']
    #allocation9 [shape = 's32[1]{0}', space=sflag, size = 0x4, scoped, tag = 'scoped memory for tpu_custom_call.1']
    #allocation10 [shape = 'u8[163840]{0}', space=vmem, size = 0x28000, scoped, tag = 'input window, operand 7, single buffered']
    #allocation11 [shape = 'u8[5120]{0}', space=vmem, size = 0x1400, scoped, tag = 'input window, operand 8, single buffered']
    #allocation12 [shape = 's32[1]{0}', space=sflag, size = 0x4, scoped, tag = 'scoped memory for tpu_custom_call.1']
    #allocation13 [shape = 'u8[10240]{0}', space=vmem, size = 0x2800, scoped, tag = 'input window, operand 9, single buffered']
    #allocation14 [shape = 'u8[10240]{0}', space=vmem, size = 0x2800, scoped, tag = 'output window, operand 0, single buffered']
    %15 = vsyncpa [#allocation3], 0
    %16 = vsyncpa [#allocation6], 0
    %17 = vsyncpa [#allocation9], 0
    %18 = vsyncpa [#allocation12], 0
    %19 = vsyncpa [#allocation4], 0
    // Predicated region
    $region2: #{tpu_custom_call.1} parent=1 // pred_check
      _
    $region3: #{tpu_custom_call.1} parent=1 // pred_check_branch
      %21 = sbr.rel (0) target = $region5
    $region4: #{tpu_custom_call.1} parent=1 // pred_region
      %23 = vsyncadd [#allocation3], 0
      %s25 = sshll.u32 %s0, 4
      %s26 = int_to_ptr.hbm [resolvable:$true] %s25
      %s27 = sshll.u32 [#allocation2], 4
      %s28 = int_to_ptr.vmem [resolvable:$true] %s27
      %30 = dma.hbm_to_vmem [thread:$0]  %s26, 32, %s28, [#allocation3]
    $region5: #{tpu_custom_call.1} parent=1 // pred_fallthru
      _
    // Predicated region
    $region6: #{tpu_custom_call.1} parent=1 // pred_check
      _
    $region7: #{tpu_custom_call.1} parent=1 // pred_check_branch
      %32 = sbr.rel (0) target = $region9
    $region8: #{tpu_custom_call.1} parent=1 // pred_region
      %34 = vsyncadd [#allocation6], 0
      %s36 = sshll.u32 %s1, 4
      %s37 = int_to_ptr.hbm [resolvable:$true] %s36
      %s38 = sshll.u32 [#allocation5], 4
      %s39 = int_to_ptr.vmem [resolvable:$true] %s38
      %41 = dma.hbm_to_vmem [thread:$0]  %s37, 128, %s39, [#allocation6]
    $region9: #{tpu_custom_call.1} parent=1 // pred_fallthru
      _
    // Predicated region
    $region10: #{tpu_custom_call.1} parent=1 // pred_check
      _
    $region11: #{tpu_custom_call.1} parent=1 // pred_check_branch
      %43 = sbr.rel (0) target = $region13
    $region12: #{tpu_custom_call.1} parent=1 // pred_region
      _
    $region13: #{tpu_custom_call.1} parent=1 // pred_fallthru
      _
    // Predicated region
    $region14: #{tpu_custom_call.1} parent=1 // pred_check
      _
    $region15: #{tpu_custom_call.1} parent=1 // pred_check_branch
      %45 = sbr.rel (0) target = $region17
    $region16: #{tpu_custom_call.1} parent=1 // pred_region
      %47 = vsyncadd [#allocation6], 0
      %s48 = sshll.u32 %s3, 4
      %s49 = int_to_ptr.hbm [resolvable:$true] %s48
      %s50 = sshll.u32 [#allocation7], 4
      %s51 = int_to_ptr.vmem [resolvable:$true] %s50
      %56 = dma.hbm_to_vmem [thread:$0]  %s49, 256, %s51, [#allocation6], 128, 128, 8
    $region17: #{tpu_custom_call.1} parent=1 // pred_fallthru
      _
    // Predicated region
    $region18: #{tpu_custom_call.1} parent=1 // pred_check
      _
    $region19: #{tpu_custom_call.1} parent=1 // pred_check_branch
      %58 = sbr.rel (0) target = $region21
    $region20: #{tpu_custom_call.1} parent=1 // pred_region
      _
    $region21: #{tpu_custom_call.1} parent=1 // pred_fallthru
      _
    // Predicated region
    $region22: #{tpu_custom_call.1} parent=1 // pred_check
      _
    $region23: #{tpu_custom_call.1} parent=1 // pred_check_branch
      %60 = sbr.rel (0) target = $region25
    $region24: #{tpu_custom_call.1} parent=1 // pred_region
      %62 = vsyncadd [#allocation9], 0
      %s63 = sshll.u32 %s5, 4
      %s64 = int_to_ptr.hbm [resolvable:$true] %s63
      %s65 = sshll.u32 [#allocation8], 4
      %s66 = int_to_ptr.vmem [resolvable:$true] %s65
      %71 = dma.hbm_to_vmem [thread:$0]  %s64, 512, %s66, [#allocation9], 128, 128, 8
    $region25: #{tpu_custom_call.1} parent=1 // pred_fallthru
      _
    // Predicated region
    $region26: #{tpu_custom_call.1} parent=1 // pred_check
      _
    $region27: #{tpu_custom_call.1} parent=1 // pred_check_branch
      %73 = sbr.rel (0) target = $region29
    $region28: #{tpu_custom_call.1} parent=1 // pred_region
      _
    $region29: #{tpu_custom_call.1} parent=1 // pred_fallthru
      _
    // Predicated region
    $region30: #{tpu_custom_call.1} parent=1 // pred_check
      _
    $region31: #{tpu_custom_call.1} parent=1 // pred_check_branch
      %75 = sbr.rel (0) target = $region33
    $region32: #{tpu_custom_call.1} parent=1 // pred_region
      %77 = vsyncadd [#allocation9], 0
      %s78 = sshll.u32 %s7, 4
      %s79 = int_to_ptr.hbm [resolvable:$true] %s78
      %s80 = sshll.u32 [#allocation10], 4
      %s81 = int_to_ptr.vmem [resolvable:$true] %s80
      %86 = dma.hbm_to_vmem [thread:$0]  %s79, 5120, %s81, [#allocation9], 640, 640, 40
    $region33: #{tpu_custom_call.1} parent=1 // pred_fallthru
      _
    // Predicated region
    $region34: #{tpu_custom_call.1} parent=1 // pred_check
      _
    $region35: #{tpu_custom_call.1} parent=1 // pred_check_branch
      %88 = sbr.rel (0) target = $region37
    $region36: #{tpu_custom_call.1} parent=1 // pred_region
      %90 = vsyncadd [#allocation12], 0
      %s92 = sshll.u32 %s8, 4
      %s93 = int_to_ptr.hbm [resolvable:$true] %s92
      %s94 = sshll.u32 [#allocation11], 4
      %s95 = int_to_ptr.vmem [resolvable:$true] %s94
      %97 = dma.hbm_to_vmem [thread:$0]  %s93, 160, %s95, [#allocation12]
    $region37: #{tpu_custom_call.1} parent=1 // pred_fallthru
      _
    // Predicated region
    $region38: #{tpu_custom_call.1} parent=1 // pred_check
      _
    $region39: #{tpu_custom_call.1} parent=1 // pred_check_branch
      %99 = sbr.rel (0) target = $region41
    $region40: #{tpu_custom_call.1} parent=1 // pred_region
      %101 = vsyncadd [#allocation12], 0
      %s103 = sshll.u32 %s9, 4
      %s104 = int_to_ptr.hbm [resolvable:$true] %s103
      %s105 = sshll.u32 [#allocation13], 4
      %s106 = int_to_ptr.vmem [resolvable:$true] %s105
      %108 = dma.hbm_to_vmem [thread:$0]  %s104, 320, %s106, [#allocation12]
    $region41: #{tpu_custom_call.1} parent=1 // pred_fallthru
      _
    // Predicated region
    $region42: #{tpu_custom_call.1} parent=1 // pred_check
      _
    $region43: #{tpu_custom_call.1} parent=1 // pred_check_branch
      %110 = sbr.rel (0) target = $region45
    $region44: #{tpu_custom_call.1} parent=1 // pred_region
      %112 = dma.done [#allocation3], 32
    $region45: #{tpu_custom_call.1} parent=1 // pred_fallthru
      _
    // Predicated region
    $region46: #{tpu_custom_call.1} parent=1 // pred_check
      _
    $region47: #{tpu_custom_call.1} parent=1 // pred_check_branch
      %114 = sbr.rel (0) target = $region49
    $region48: #{tpu_custom_call.1} parent=1 // pred_region
      %116 = dma.done [#allocation6], 128
    $region49: #{tpu_custom_call.1} parent=1 // pred_fallthru
      _
    // Predicated region
    $region50: #{tpu_custom_call.1} parent=1 // pred_check
      _
    $region51: #{tpu_custom_call.1} parent=1 // pred_check_branch
      %118 = sbr.rel (0) target = $region53
    $region52: #{tpu_custom_call.1} parent=1 // pred_region
      %120 = dma.done [#allocation6], 256
    $region53: #{tpu_custom_call.1} parent=1 // pred_fallthru
      _
    // Predicated region
    $region54: #{tpu_custom_call.1} parent=1 // pred_check
      _
    $region55: #{tpu_custom_call.1} parent=1 // pred_check_branch
      %122 = sbr.rel (0) target = $region57
    $region56: #{tpu_custom_call.1} parent=1 // pred_region
      %124 = dma.done [#allocation9], 512
    $region57: #{tpu_custom_call.1} parent=1 // pred_fallthru
      _
    // Predicated region
    $region58: #{tpu_custom_call.1} parent=1 // pred_check
      _
    $region59: #{tpu_custom_call.1} parent=1 // pred_check_branch
      %126 = sbr.rel (0) target = $region61
    $region60: #{tpu_custom_call.1} parent=1 // pred_region
      %128 = dma.done [#allocation9], 5120
    $region61: #{tpu_custom_call.1} parent=1 // pred_fallthru
      _
    // Predicated region
    $region62: #{tpu_custom_call.1} parent=1 // pred_check
      _
    $region63: #{tpu_custom_call.1} parent=1 // pred_check_branch
      %130 = sbr.rel (0) target = $region65
    $region64: #{tpu_custom_call.1} parent=1 // pred_region
      %132 = dma.done [#allocation12], 160
    $region65: #{tpu_custom_call.1} parent=1 // pred_fallthru
      _
    // Predicated region
    $region66: #{tpu_custom_call.1} parent=1 // pred_check
      _
    $region67: #{tpu_custom_call.1} parent=1 // pred_check_branch
      %134 = sbr.rel (0) target = $region69
    $region68: #{tpu_custom_call.1} parent=1 // pred_region
      %136 = dma.done [#allocation12], 320
    $region69: #{tpu_custom_call.1} parent=1 // pred_fallthru
      _
    %v138 = vld [vmem:[#allocation2] sm:$0x3]
    %v139 = vld [vmem:[#allocation5] sm:$0x7f]
    %v140 = vld [vmem:[%s2] sm:$0x1]
    %v142 = vperm.slane %v140, 0
    %vm144 = vcmask 56320
    %v146 = vsel %vm144, %v138, 0
    %vm148 = vcmask 1046528
    %v150 = vsel %vm148, %v139, 0
    %152 = vmatpush.msra.mxu0 0.0
    %153 = vmatpush.msra.mxu0 0.0
    %154 = vmatpush.msra.mxu0 0.0
    %155 = vmatpush.msra.mxu0 0.0
    %156 = vmatpush.msra.mxu0 0.0
    %157 = vmatpush.msra.mxu0 0.0
    %158 = vmatpush.msra.mxu0 0.0
    %159 = vmatpush.msra.mxu0 0.0
    %160 = vmatpush.msra.mxu0 0.0
    %161 = vmatpush.msra.mxu0 0.0
    %162 = vmatpush.msra.mxu0 0.0
    %163 = vmatpush.msra.mxu0 0.0
    %164 = vmatpush.msra.mxu0 0.0
    %165 = vmatpush.msra.mxu0 0.0
    %166 = vmatpush.msra.mxu0 0.0
    %167 = vmatpush.msra.mxu0 %v150
    %168 = vmatmul.f32.gmra.mxu0 %v146
    %v169 = vpop.f32.mrf.mxu0
    %v170 = vadd.f32 %v142, %v169
    %171 = vdwg.mxu0
    %v172 = vmax.f32 %v170, 0.0
    %v173 = vld [vmem:[#allocation7] sm:$0xff]
    %v174 = vld [vmem:[#allocation7 + $0x8] sm:$0xff]
    %v175 = vld [vmem:[%s4] sm:$0x1]
    %v177 = vperm.slane %v175, 0
    %vm179 = vcmask 130048
    %v181 = vsel %vm179, %v172, 0
    %183 = vmatpush.msra.mxu0 0.0
    %184 = vmatpush.msra.mxu0 0.0
    %185 = vmatpush.msra.mxu0 0.0
    %186 = vmatpush.msra.mxu0 0.0
    %187 = vmatpush.msra.mxu0 0.0
    %188 = vmatpush.msra.mxu0 0.0
    %189 = vmatpush.msra.mxu0 0.0
    %190 = vmatpush.msra.mxu0 0.0
    %191 = vmatpush.msra.mxu0 0.0
    %192 = vmatpush.msra.mxu0 0.0
    %193 = vmatpush.msra.mxu0 0.0
    %194 = vmatpush.msra.mxu0 0.0
    %195 = vmatpush.msra.mxu0 0.0
    %196 = vmatpush.msra.mxu0 0.0
    %197 = vmatpush.msra.mxu0 %v174
    %198 = vmatpush.msra.mxu0 %v173
    %199 = vmatmul.f32.gmra.mxu0 %v181
    %v200 = vpop.f32.mrf.mxu0
    %v201 = vadd.f32 %v177, %v200
    %202 = vdwg.mxu0
    %v203 = vmax.f32 %v201, 0.0
    %v204 = vld [vmem:[#allocation8] sm:$0xff]
    %v205 = vld [vmem:[#allocation8 + $0x8] sm:$0xff]
    %v206 = vld [vmem:[#allocation8 + $0x10] sm:$0xff]
    %v207 = vld [vmem:[#allocation8 + $0x18] sm:$0xff]
    %v208 = vld [vmem:[%s6] sm:$0x1]
    %v210 = vperm.slane %v208, 0
    %vm212 = vcmask 261120
    %v214 = vsel %vm212, %v203, 0
    %216 = vmatpush.msra.mxu0 0.0
    %217 = vmatpush.msra.mxu0 0.0
    %218 = vmatpush.msra.mxu0 0.0
    %219 = vmatpush.msra.mxu0 0.0
    %220 = vmatpush.msra.mxu0 0.0
    %221 = vmatpush.msra.mxu0 0.0
    %222 = vmatpush.msra.mxu0 0.0
    %223 = vmatpush.msra.mxu0 0.0
    %224 = vmatpush.msra.mxu0 0.0
    %225 = vmatpush.msra.mxu0 0.0
    %226 = vmatpush.msra.mxu0 0.0
    %227 = vmatpush.msra.mxu0 0.0
    %228 = vmatpush.msra.mxu0 %v207
    %229 = vmatpush.msra.mxu0 %v206
    %230 = vmatpush.msra.mxu0 %v205
    %231 = vmatpush.msra.mxu0 %v204
    %232 = vmatmul.f32.gmra.mxu0 %v214
    %v233 = vpop.f32.mrf.mxu0
    %v234 = vadd.f32 %v210, %v233
    %235 = vdwg.mxu0
    %v236 = vmax.f32 %v234, 0.0
    %v237 = vpack.c.bf16 %v236, %v236
    %v238 = vld [vmem:[#allocation10] sm:$0xff]
    %v239 = vld [vmem:[#allocation10 + $0x8] sm:$0xff]
    %v240 = vld [vmem:[#allocation10 + $0x10] sm:$0xff]
    %v241 = vld [vmem:[#allocation10 + $0x18] sm:$0xff]
    %v242 = vld [vmem:[#allocation10 + $0x20] sm:$0xff]
    %v243 = vld [vmem:[#allocation10 + $0x28] sm:$0xff]
    %v244 = vld [vmem:[#allocation10 + $0x30] sm:$0xff]
    %v245 = vld [vmem:[#allocation10 + $0x38] sm:$0xff]
    %v246 = vld [vmem:[#allocation10 + $0x40] sm:$0xff]
    %v247 = vld [vmem:[#allocation10 + $0x48] sm:$0xff]
    %v248 = vld [vmem:[#allocation10 + $0x50] sm:$0xff]
    %v249 = vld [vmem:[#allocation10 + $0x58] sm:$0xff]
    %v250 = vld [vmem:[#allocation10 + $0x60] sm:$0xff]
    %v251 = vld [vmem:[#allocation10 + $0x68] sm:$0xff]
    %v252 = vld [vmem:[#allocation10 + $0x70] sm:$0xff]
    %v253 = vld [vmem:[#allocation10 + $0x78] sm:$0xff]
    %v254 = vld [vmem:[#allocation10 + $0x80] sm:$0xff]
    %v255 = vld [vmem:[#allocation10 + $0x88] sm:$0xff]
    %v256 = vld [vmem:[#allocation10 + $0x90] sm:$0xff]
    %v257 = vld [vmem:[#allocation10 + $0x98] sm:$0xff]
    %v258 = vld [vmem:[#allocation10 + $0xa0] sm:$0xff]
    %v259 = vld [vmem:[#allocation10 + $0xa8] sm:$0xff]
    %v260 = vld [vmem:[#allocation10 + $0xb0] sm:$0xff]
    %v261 = vld [vmem:[#allocation10 + $0xb8] sm:$0xff]
    %v262 = vld [vmem:[#allocation10 + $0xc0] sm:$0xff]
    %v263 = vld [vmem:[#allocation10 + $0xc8] sm:$0xff]
    %v264 = vld [vmem:[#allocation10 + $0xd0] sm:$0xff]
    %v265 = vld [vmem:[#allocation10 + $0xd8] sm:$0xff]
    %v266 = vld [vmem:[#allocation10 + $0xe0] sm:$0xff]
    %v267 = vld [vmem:[#allocation10 + $0xe8] sm:$0xff]
    %v268 = vld [vmem:[#allocation10 + $0xf0] sm:$0xff]
    %v269 = vld [vmem:[#allocation10 + $0xf8] sm:$0xff]
    %v270 = vld [vmem:[#allocation10 + $0x100] sm:$0xff]
    %v271 = vld [vmem:[#allocation10 + $0x108] sm:$0xff]
    %v272 = vld [vmem:[#allocation10 + $0x110] sm:$0xff]
    %v273 = vld [vmem:[#allocation10 + $0x118] sm:$0xff]
    %v274 = vld [vmem:[#allocation10 + $0x120] sm:$0xff]
    %v275 = vld [vmem:[#allocation10 + $0x128] sm:$0xff]
    %v276 = vld [vmem:[#allocation10 + $0x130] sm:$0xff]
    %v277 = vld [vmem:[#allocation10 + $0x138] sm:$0xff]
    %v278 = vld [vmem:[#allocation11] sm:$0xff]
    %v279 = vld [vmem:[#allocation11 + $0x8] sm:$0x3]
    %v282 = vperm.slane %v278, 0
    %v283 = vperm.slane %v278, 1
    %v284 = vperm.slane %v278, 2
    %v285 = vperm.slane %v278, 3
    %v286 = vperm.slane %v278, 4
    %v287 = vperm.slane %v278, 5
    %v288 = vperm.slane %v278, 6
    %v289 = vperm.slane %v278, 7
    %v290 = vperm.slane %v279, 0
    %v291 = vperm.slane %v279, 1
    %v342 = vunpack.c.l.b16 %v238
    %v343 = vunpack.c.h.b16 %v238
    %v344 = vunpack.c.l.b16 %v239
    %v345 = vunpack.c.h.b16 %v239
    %v346 = vunpack.c.l.b16 %v240
    %v347 = vunpack.c.h.b16 %v240
    %v348 = vunpack.c.l.b16 %v241
    %v349 = vunpack.c.h.b16 %v241
    %v350 = vunpack.c.l.b16 %v242
    %v351 = vunpack.c.h.b16 %v242
    %v352 = vunpack.c.l.b16 %v243
    %v353 = vunpack.c.h.b16 %v243
    %v354 = vunpack.c.l.b16 %v244
    %v355 = vunpack.c.h.b16 %v244
    %v356 = vunpack.c.l.b16 %v245
    %v357 = vunpack.c.h.b16 %v245
    %v358 = vunpack.c.l.b16 %v246
    %v359 = vunpack.c.h.b16 %v246
    %v360 = vunpack.c.l.b16 %v247
    %v361 = vunpack.c.h.b16 %v247
    %v362 = vunpack.c.l.b16 %v248
    %v363 = vunpack.c.h.b16 %v248
    %v364 = vunpack.c.l.b16 %v249
    %v365 = vunpack.c.h.b16 %v249
    %v366 = vunpack.c.l.b16 %v250
    %v367 = vunpack.c.h.b16 %v250
    %v368 = vunpack.c.l.b16 %v251
    %v369 = vunpack.c.h.b16 %v251
    %v370 = vunpack.c.l.b16 %v252
    %v371 = vunpack.c.h.b16 %v252
    %v372 = vunpack.c.l.b16 %v253
    %v373 = vunpack.c.h.b16 %v253
    %v374 = vunpack.c.l.b16 %v254
    %v375 = vunpack.c.h.b16 %v254
    %v376 = vunpack.c.l.b16 %v255
    %v377 = vunpack.c.h.b16 %v255
    %v378 = vunpack.c.l.b16 %v256
    %v379 = vunpack.c.h.b16 %v256
    %v380 = vunpack.c.l.b16 %v257
    %v381 = vunpack.c.h.b16 %v257
    %v382 = vunpack.c.l.b16 %v258
    %v383 = vunpack.c.h.b16 %v258
    %v384 = vunpack.c.l.b16 %v259
    %v385 = vunpack.c.h.b16 %v259
    %v386 = vunpack.c.l.b16 %v260
    %v387 = vunpack.c.h.b16 %v260
    %v388 = vunpack.c.l.b16 %v261
    %v389 = vunpack.c.h.b16 %v261
    %v390 = vunpack.c.l.b16 %v262
    %v391 = vunpack.c.h.b16 %v262
    %v392 = vunpack.c.l.b16 %v263
    %v393 = vunpack.c.h.b16 %v263
    %v394 = vunpack.c.l.b16 %v264
    %v395 = vunpack.c.h.b16 %v264
    %v396 = vunpack.c.l.b16 %v265
    %v397 = vunpack.c.h.b16 %v265
    %v398 = vunpack.c.l.b16 %v266
    %v399 = vunpack.c.h.b16 %v266
    %v400 = vunpack.c.l.b16 %v267
    %v401 = vunpack.c.h.b16 %v267
    %v402 = vunpack.c.l.b16 %v268
    %v403 = vunpack.c.h.b16 %v268
    %v404 = vunpack.c.l.b16 %v269
    %v405 = vunpack.c.h.b16 %v269
    %v406 = vunpack.c.l.b16 %v270
    %v407 = vunpack.c.h.b16 %v270
    %v408 = vunpack.c.l.b16 %v271
    %v409 = vunpack.c.h.b16 %v271
    %v410 = vunpack.c.l.b16 %v272
    %v411 = vunpack.c.h.b16 %v272
    %v412 = vunpack.c.l.b16 %v273
    %v413 = vunpack.c.h.b16 %v273
    %v414 = vunpack.c.l.b16 %v274
    %v415 = vunpack.c.h.b16 %v274
    %v416 = vunpack.c.l.b16 %v275
    %v417 = vunpack.c.h.b16 %v275
    %v418 = vunpack.c.l.b16 %v276
    %v419 = vunpack.c.h.b16 %v276
    %v420 = vunpack.c.l.b16 %v277
    %v421 = vunpack.c.h.b16 %v277
    %v422 = vpack.c.b16 %v352, %v342
    %v423 = vpack.c.b16 %v353, %v343
    %v424 = vpack.c.b16 %v354, %v344
    %v425 = vpack.c.b16 %v355, %v345
    %v426 = vpack.c.b16 %v356, %v346
    %v427 = vpack.c.b16 %v357, %v347
    %v428 = vpack.c.b16 %v358, %v348
    %v429 = vpack.c.b16 %v359, %v349
    %v430 = vpack.c.b16 %v360, %v350
    %v431 = vpack.c.b16 %v361, %v351
    %v432 = vpack.c.b16 %v372, %v362
    %v433 = vpack.c.b16 %v373, %v363
    %v434 = vpack.c.b16 %v374, %v364
    %v435 = vpack.c.b16 %v375, %v365
    %v436 = vpack.c.b16 %v376, %v366
    %v437 = vpack.c.b16 %v377, %v367
    %v438 = vpack.c.b16 %v378, %v368
    %v439 = vpack.c.b16 %v379, %v369
    %v440 = vpack.c.b16 %v380, %v370
    %v441 = vpack.c.b16 %v381, %v371
    %v442 = vpack.c.b16 %v392, %v382
    %v443 = vpack.c.b16 %v393, %v383
    %v444 = vpack.c.b16 %v394, %v384
    %v445 = vpack.c.b16 %v395, %v385
    %v446 = vpack.c.b16 %v396, %v386
    %v447 = vpack.c.b16 %v397, %v387
    %v448 = vpack.c.b16 %v398, %v388
    %v449 = vpack.c.b16 %v399, %v389
    %v450 = vpack.c.b16 %v400, %v390
    %v451 = vpack.c.b16 %v401, %v391
    %v452 = vpack.c.b16 %v412, %v402
    %v453 = vpack.c.b16 %v413, %v403
    %v454 = vpack.c.b16 %v414, %v404
    %v455 = vpack.c.b16 %v415, %v405
    %v456 = vpack.c.b16 %v416, %v406
    %v457 = vpack.c.b16 %v417, %v407
    %v458 = vpack.c.b16 %v418, %v408
    %v459 = vpack.c.b16 %v419, %v409
    %v460 = vpack.c.b16 %v420, %v410
    %v461 = vpack.c.b16 %v421, %v411
    %vm502 = vcmask 523264
    %v504 = vsel %vm502, %v237, 0
    %506 = vmatpush.bf16.msra.mxu0 0
    %507 = vmatpush.bf16.msra.mxu0 0
    %508 = vmatpush.bf16.msra.mxu0 0
    %509 = vmatpush.bf16.msra.mxu0 0
    %510 = vmatpush.bf16.msra.mxu0 %v452
    %511 = vmatpush.bf16.msra.mxu0 %v442
    %512 = vmatpush.bf16.msra.mxu0 %v432
    %513 = vmatpush.bf16.msra.mxu0 %v422
    %514 = vmatmul.bf16.gmra.mxu0 %v504
    %v515 = vpop.f32.mrf.mxu0
    %v516 = vadd.f32 %v282, %v515
    %v517 = vpop.f32.mrf.mxu0
    %518 = vdwg.mxu0
    %519 = vmatpush.bf16.msra.mxu0 0
    %520 = vmatpush.bf16.msra.mxu0 0
    %521 = vmatpush.bf16.msra.mxu0 0
    %522 = vmatpush.bf16.msra.mxu0 0
    %523 = vmatpush.bf16.msra.mxu0 %v453
    %524 = vmatpush.bf16.msra.mxu0 %v443
    %525 = vmatpush.bf16.msra.mxu0 %v433
    %526 = vmatpush.bf16.msra.mxu0 %v423
    %527 = vmatmul.bf16.gmra.mxu0 %v504
    %v528 = vpop.f32.mrf.mxu0
    %v529 = vadd.f32 %v283, %v528
    %v530 = vpop.f32.mrf.mxu0
    %531 = vdwg.mxu0
    %532 = vmatpush.bf16.msra.mxu0 0
    %533 = vmatpush.bf16.msra.mxu0 0
    %534 = vmatpush.bf16.msra.mxu0 0
    %535 = vmatpush.bf16.msra.mxu0 0
    %536 = vmatpush.bf16.msra.mxu0 %v454
    %537 = vmatpush.bf16.msra.mxu0 %v444
    %538 = vmatpush.bf16.msra.mxu0 %v434
    %539 = vmatpush.bf16.msra.mxu0 %v424
    %540 = vmatmul.bf16.gmra.mxu0 %v504
    %v541 = vpop.f32.mrf.mxu0
    %v542 = vadd.f32 %v284, %v541
    %v543 = vpop.f32.mrf.mxu0
    %544 = vdwg.mxu0
    %545 = vmatpush.bf16.msra.mxu0 0
    %546 = vmatpush.bf16.msra.mxu0 0
    %547 = vmatpush.bf16.msra.mxu0 0
    %548 = vmatpush.bf16.msra.mxu0 0
    %549 = vmatpush.bf16.msra.mxu0 %v455
    %550 = vmatpush.bf16.msra.mxu0 %v445
    %551 = vmatpush.bf16.msra.mxu0 %v435
    %552 = vmatpush.bf16.msra.mxu0 %v425
    %553 = vmatmul.bf16.gmra.mxu0 %v504
    %v554 = vpop.f32.mrf.mxu0
    %v555 = vadd.f32 %v285, %v554
    %v556 = vpop.f32.mrf.mxu0
    %557 = vdwg.mxu0
    %558 = vmatpush.bf16.msra.mxu0 0
    %559 = vmatpush.bf16.msra.mxu0 0
    %560 = vmatpush.bf16.msra.mxu0 0
    %561 = vmatpush.bf16.msra.mxu0 0
    %562 = vmatpush.bf16.msra.mxu0 %v456
    %563 = vmatpush.bf16.msra.mxu0 %v446
    %564 = vmatpush.bf16.msra.mxu0 %v436
    %565 = vmatpush.bf16.msra.mxu0 %v426
    %566 = vmatmul.bf16.gmra.mxu0 %v504
    %v567 = vpop.f32.mrf.mxu0
    %v568 = vadd.f32 %v286, %v567
    %v569 = vpop.f32.mrf.mxu0
    %570 = vdwg.mxu0
    %571 = vmatpush.bf16.msra.mxu0 0
    %572 = vmatpush.bf16.msra.mxu0 0
    %573 = vmatpush.bf16.msra.mxu0 0
    %574 = vmatpush.bf16.msra.mxu0 0
    %575 = vmatpush.bf16.msra.mxu0 %v457
    %576 = vmatpush.bf16.msra.mxu0 %v447
    %577 = vmatpush.bf16.msra.mxu0 %v437
    %578 = vmatpush.bf16.msra.mxu0 %v427
    %579 = vmatmul.bf16.gmra.mxu0 %v504
    %v580 = vpop.f32.mrf.mxu0
    %v581 = vadd.f32 %v287, %v580
    %v582 = vpop.f32.mrf.mxu0
    %583 = vdwg.mxu0
    %584 = vmatpush.bf16.msra.mxu0 0
    %585 = vmatpush.bf16.msra.mxu0 0
    %586 = vmatpush.bf16.msra.mxu0 0
    %587 = vmatpush.bf16.msra.mxu0 0
    %588 = vmatpush.bf16.msra.mxu0 %v458
    %589 = vmatpush.bf16.msra.mxu0 %v448
    %590 = vmatpush.bf16.msra.mxu0 %v438
    %591 = vmatpush.bf16.msra.mxu0 %v428
    %592 = vmatmul.bf16.gmra.mxu0 %v504
    %v593 = vpop.f32.mrf.mxu0
    %v594 = vadd.f32 %v288, %v593
    %v595 = vpop.f32.mrf.mxu0
    %596 = vdwg.mxu0
    %597 = vmatpush.bf16.msra.mxu0 0
    %598 = vmatpush.bf16.msra.mxu0 0
    %599 = vmatpush.bf16.msra.mxu0 0
    %600 = vmatpush.bf16.msra.mxu0 0
    %601 = vmatpush.bf16.msra.mxu0 %v459
    %602 = vmatpush.bf16.msra.mxu0 %v449
    %603 = vmatpush.bf16.msra.mxu0 %v439
    %604 = vmatpush.bf16.msra.mxu0 %v429
    %605 = vmatmul.bf16.gmra.mxu0 %v504
    %v606 = vpop.f32.mrf.mxu0
    %v607 = vadd.f32 %v289, %v606
    %v608 = vpop.f32.mrf.mxu0
    %609 = vdwg.mxu0
    %610 = vmatpush.bf16.msra.mxu0 0
    %611 = vmatpush.bf16.msra.mxu0 0
    %612 = vmatpush.bf16.msra.mxu0 0
    %613 = vmatpush.bf16.msra.mxu0 0
    %614 = vmatpush.bf16.msra.mxu0 %v460
    %615 = vmatpush.bf16.msra.mxu0 %v450
    %616 = vmatpush.bf16.msra.mxu0 %v440
    %617 = vmatpush.bf16.msra.mxu0 %v430
    %618 = vmatmul.bf16.gmra.mxu0 %v504
    %v619 = vpop.f32.mrf.mxu0
    %v620 = vadd.f32 %v290, %v619
    %v621 = vpop.f32.mrf.mxu0
    %622 = vdwg.mxu0
    %623 = vmatpush.bf16.msra.mxu0 0
    %624 = vmatpush.bf16.msra.mxu0 0
    %625 = vmatpush.bf16.msra.mxu0 0
    %626 = vmatpush.bf16.msra.mxu0 0
    %627 = vmatpush.bf16.msra.mxu0 %v461
    %628 = vmatpush.bf16.msra.mxu0 %v451
    %629 = vmatpush.bf16.msra.mxu0 %v441
    %630 = vmatpush.bf16.msra.mxu0 %v431
    %631 = vmatmul.bf16.gmra.mxu0 %v504
    %v632 = vpop.f32.mrf.mxu0
    %v633 = vadd.f32 %v291, %v632
    %v634 = vpop.f32.mrf.mxu0
    %635 = vdwg.mxu0
    %v636 = vld [vmem:[#allocation13] sm:$0xff]
    %v637 = vld [vmem:[#allocation13 + $0x8] sm:$0xff]
    %v638 = vld [vmem:[#allocation13 + $0x10] sm:$0xf]
    %642 = vst [vmem:[#allocation1] ss:$4 sm:$0xff] %v636
    %s643 = scalar_lea.vmem [#allocation1], 32
    %644 = vst [vmem:[%s643] ss:$4 sm:$0xff] %v637
    %v645 = vld.sshfl [vmem:[#allocation1] sm:$0xff pattern:$0x73625140]
    %v646 = vld.sshfl [vmem:[#allocation1 + $0x8] sm:$0xff pattern:$0x73625140]
    %v647 = vld.sshfl [vmem:[#allocation1 + $0x10] sm:$0xff pattern:$0x73625140]
    %v648 = vld.sshfl [vmem:[#allocation1 + $0x18] sm:$0xff pattern:$0x73625140]
    %v649 = vld.sshfl [vmem:[#allocation1 + $0x20] sm:$0xff pattern:$0x73625140]
    %v650 = vld.sshfl [vmem:[#allocation1 + $0x28] sm:$0xff pattern:$0x73625140]
    %v651 = vld.sshfl [vmem:[#allocation1 + $0x30] sm:$0xff pattern:$0x73625140]
    %v652 = vld.sshfl [vmem:[#allocation1 + $0x38] sm:$0xff pattern:$0x73625140]
    %653 = vst [vmem:[#allocation1] ss:$4 sm:$0xff] %v638
    %v654 = vld.sshfl [vmem:[#allocation1] sm:$0xff pattern:$0x73625140]
    %v655 = vld.sshfl [vmem:[#allocation1 + $0x8] sm:$0xff pattern:$0x73625140]
    %v666 = vadd.f32 %v516, %v645
    %v667 = vadd.f32 %v529, %v646
    %v668 = vadd.f32 %v542, %v647
    %v669 = vadd.f32 %v555, %v648
    %v670 = vadd.f32 %v568, %v649
    %v671 = vadd.f32 %v581, %v650
    %v672 = vadd.f32 %v594, %v651
    %v673 = vadd.f32 %v607, %v652
    %v674 = vadd.f32 %v620, %v654
    %v675 = vadd.f32 %v633, %v655
    %vm676 = vcmp.ge.f32.partialorder %v666, 0.0
    %vm677 = vcmp.ge.f32.partialorder %v667, 0.0
    %vm678 = vcmp.ge.f32.partialorder %v668, 0.0
    %vm679 = vcmp.ge.f32.partialorder %v669, 0.0
    %vm680 = vcmp.ge.f32.partialorder %v670, 0.0
    %vm681 = vcmp.ge.f32.partialorder %v671, 0.0
    %vm682 = vcmp.ge.f32.partialorder %v672, 0.0
    %vm683 = vcmp.ge.f32.partialorder %v673, 0.0
    %vm684 = vcmp.ge.f32.partialorder %v674, 0.0
    %vm685 = vcmp.ge.f32.partialorder %v675, 0.0
    %v686 = vsel %vm676, 1.0, 0.0
    %v687 = vsel %vm677, 1.0, 0.0
    %v688 = vsel %vm678, 1.0, 0.0
    %v689 = vsel %vm679, 1.0, 0.0
    %v690 = vsel %vm680, 1.0, 0.0
    %v691 = vsel %vm681, 1.0, 0.0
    %v692 = vsel %vm682, 1.0, 0.0
    %v693 = vsel %vm683, 1.0, 0.0
    %v694 = vsel %vm684, 1.0, 0.0
    %v695 = vsel %vm685, 1.0, 0.0
    %v706 = vrot.slane %v687, 6
    %v707 = vrot.slane %v688, 4
    %v708 = vrot.slane %v689, 2
    %v709 = vrot.slane %v691, 6
    %v710 = vrot.slane %v692, 4
    %v711 = vrot.slane %v693, 2
    %v712 = vrot.slane %v695, 6
    %vm713 = vcmask 1041408
    %v714 = vsel %vm713, %v686, %v706
    %vm715 = vcmask 1045508
    %v716 = vsel %vm715, %v707, %v708
    %vm717 = vcmask 1043456
    %v718 = vsel %vm717, %v714, %v716
    %v719 = vsel %vm713, %v690, %v709
    %v720 = vsel %vm715, %v710, %v711
    %v721 = vsel %vm717, %v719, %v720
    %v722 = vsel %vm713, %v694, %v712
    %726 = vst [vmem:[#allocation14] sm:$0xff] %v718
    %727 = vst [vmem:[#allocation14 + $0x8] sm:$0xff] %v721
    %728 = vst [vmem:[#allocation14 + $0x10] sm:$0xf] %v722
    // Predicated region
    $region70: #{tpu_custom_call.1} parent=1 // pred_check
      _
    $region71: #{tpu_custom_call.1} parent=1 // pred_check_branch
      %730 = sbr.rel (0) target = $region73
    $region72: #{tpu_custom_call.1} parent=1 // pred_region
      %732 = vsyncadd [#allocation4], 0
      %s734 = sshll.u32 [#allocation14], 4
      %s735 = int_to_ptr.vmem [resolvable:$true] %s734
      %s736 = sshll.u32 %s10, 4
      %s737 = int_to_ptr.hbm [resolvable:$true] %s736
      %739 = dma.vmem_to_hbm [thread:$0]  %s735, 320, %s737, [#allocation4]
    $region73: #{tpu_custom_call.1} parent=1 // pred_fallthru
      _
    // Predicated region
    $region74: #{tpu_custom_call.1} parent=1 // pred_check
      _
    $region75: #{tpu_custom_call.1} parent=1 // pred_check_branch
      %741 = sbr.rel (0) target = $region77
    $region76: #{tpu_custom_call.1} parent=1 // pred_region
      %743 = dma.done [#allocation4], 320
    $region77: #{tpu_custom_call.1} parent=1 // pred_fallthru
      _
    %744 = vsyncpa [#allocation3], 1
    %745 = vsyncpa [#allocation6], 1
    %746 = vsyncpa [#allocation9], 1
    %747 = vsyncpa [#allocation12], 1
    %748 = vsyncpa [#allocation4], 1

</llo_original>
